<compile_context>
chip_gen: v7x
topology: tpu7x:2x2x1
jax: 0.10.0
libtpu: 0.0.40
codegen_flags: <defaults>
</compile_context>

<pallas_src>
import jax
import jax.numpy as jnp
from jax.experimental import pallas as pl
from jax.experimental.pallas import tpu as pltpu


# --------------------------------------------------------------------------------- kernel

def masked_softmax_kernel(x_ref, m_ref, o_ref):
    # x_ref: (1, h_tile, Tq, Sk) scores block; m_ref: (1, 1|h_tile, Tq, Sk) mask block.
    x = x_ref[...].astype(jnp.float32)                        # torch: input.to(float32)
    m = m_ref[...]
    masked = m if jnp.dtype(m_ref.dtype) == jnp.dtype(jnp.bool_) else (m != 0)
    x = jnp.where(masked, jnp.finfo(jnp.float32).min, x)      # masked_fill(mask, finfo(f32).min)
    x_max = jnp.max(x, axis=-1, keepdims=True)                # numerically-stable softmax
    e = jnp.exp(x - x_max)
    denom = jnp.sum(e, axis=-1, keepdims=True)
    if jnp.dtype(o_ref.dtype) == jnp.dtype(jnp.float32):
        probs = e / denom                                     # exact divide for f32 outputs
    else:
        probs = e * pl.reciprocal(denom, approx=True)         # EUP vrcp (free slot); ample for bf16
    o_ref[...] = probs.astype(o_ref.dtype)


# --------------------------------------------------------------------------------- planning

def _vmem_capacity_bytes():
    try:
        info = pltpu.get_tpu_info()
        for name in ("vmem_capacity_bytes", "vmem_size_bytes", "vmem_bytes"):
            cap = getattr(info, name, None)
            if cap:
                return int(cap)
    except Exception:
        pass
    return 64 * 1024 * 1024   # conservative default: v7x per-TensorCore VMEM


def _plan(B, H, Sq, Sk_pad, in_dtype):
    """Choose (h_tile, tile_q, vmem_limit_bytes) for the (B, q-tiles, h-tiles) grid."""
    itemsize = jnp.dtype(in_dtype).itemsize
    cap = _vmem_capacity_bytes()
    # Generation-aware scoped-VMEM limit: ~44 MiB on v7x (64 MiB/TC), ~90 MiB on v5e/v6e (128 MiB).
    vmem_limit = min(int(cap * 0.70), 100 * 1024 * 1024)

    # Footprint per (head, q) row of a block: double-buffered in+out DMA blocks (2*2*itemsize)
    # + ~3 live f32 temporaries (12 B) + the double-buffered one-byte mask row.
    bytes_per_row = Sk_pad * (4 * itemsize + 12) + 2 * Sk_pad
    # Guarantee the smallest legal block (8 rows) still fits under the limit for huge Sk.
    vmem_limit = max(vmem_limit, min(int(cap * 0.90), int(8 * bytes_per_row * 1.25)))

    block_budget = vmem_limit // 2
    row_target = 2048            # amortizes ~0.35 us/grid-step; past the HBM roofline knee
    rows = max(8, min(row_target, block_budget // max(bytes_per_row, 1)))

    # Sublane alignment preference: 32 (int8 mask packing) -> 16 (bf16 vregs) -> 8 (f32 minimum).
    if Sq >= 32 and rows >= 32:
        q_align = 32
    elif Sq >= 16 and rows >= 16 and itemsize <= 2:
        q_align = 16
    else:
        q_align = 8

    if Sq <= q_align:
        tile_q = Sq                                   # full second-to-last dim: always legal
        h_tile = max(1, min(H, rows // max(tile_q, 1)))
    elif rows >= H * q_align:
        # Budget allows folding every head into the block (mask DMA'd once per (b, q-tile)).
        h_tile = H
        per_h = rows // H
        tile_q = Sq if per_h >= Sq else max(q_align, (per_h // q_align) * q_align)
    else:
        # Large H*Sk: keep tile_q small and split the head axis over the innermost grid dim.
        # The mask index_map ignores h, so the mask block stays resident (no per-head re-DMA).
        tile_q = q_align
        h_tile = max(1, min(H, rows // tile_q))

    # v7x: keep both TensorCores busy and the DMA pipeline full (>= 8 grid steps), but only
    # shrink while the block stays comfortably large (>= ~256 rows after a halving).
    def nsteps(h_t, t_q):
        return B * pl.cdiv(Sq, t_q) * pl.cdiv(H, h_t)

    while nsteps(h_tile, tile_q) < 8 and h_tile * tile_q >= 512:
        if tile_q > q_align:
            tile_q = max(q_align, ((tile_q // 2) // q_align) * q_align)
        elif h_tile > 1:
            h_tile = max(1, h_tile // 2)
        else:
            break

    return h_tile, tile_q, int(vmem_limit)


# --------------------------------------------------------------------------------- wrapper

_BOOL_MASK_OK = None   # lazily probed once: can Pallas TPU DMA bool blocks directly?


def _bool_mask_supported():
    global _BOOL_MASK_OK
    if _BOOL_MASK_OK is None:
        def probe_kernel(m_ref, o_ref):
            o_ref[...] = jnp.where(m_ref[...], 1.0, 0.0).astype(o_ref.dtype)
        try:
            out = pl.pallas_call(
                probe_kernel,
                out_shape=jax.ShapeDtypeStruct((8, 128), jnp.float32),
            )(jnp.zeros((8, 128), jnp.bool_))
            jax.block_until_ready(out)
            _BOOL_MASK_OK = True
        except Exception:
            _BOOL_MASK_OK = False
    return _BOOL_MASK_OK


def masked_softmax(inp, mask):
    """inp: [B, H, Sq, Sk] float scores.  mask: [B, 1|H, Sq, Sk], True/nonzero = masked out.
    Returns softmax(masked_fill(inp.float(), mask, finfo(f32).min), axis=-1).astype(inp.dtype)."""
    B, H, Sq, Sk = inp.shape
    mB, mH, mSq, mSk = mask.shape
    assert (mB, mSq, mSk) == (B, Sq, Sk) and mH in (1, H), (inp.shape, mask.shape)

    # Lane-dense stores: pad Sk to a multiple of 128.  Padding scores are -inf (exp -> exactly
    # 0), so partially- and fully-masked rows both keep the exact PyTorch semantics.
    Sk_pad = ((Sk + 127) // 128) * 128
    if Sk_pad != Sk:
        pad = ((0, 0), (0, 0), (0, 0), (0, Sk_pad - Sk))
        inp_p = jnp.pad(inp, pad, constant_values=-jnp.inf)
        mask_p = jnp.pad(mask, pad, constant_values=False)
    else:
        inp_p, mask_p = inp, mask

    # No out-of-kernel astype HBM pass for the mask unless the backend can't take bool blocks.
    if mask_p.dtype == jnp.bool_ and not _bool_mask_supported():
        mask_p = mask_p.astype(jnp.int8)

    h_tile, tile_q, vmem_limit = _plan(B, H, Sq, Sk_pad, inp.dtype)
    grid = (B, pl.cdiv(Sq, tile_q), pl.cdiv(H, h_tile))

    x_spec = pl.BlockSpec((1, h_tile, tile_q, Sk_pad), lambda b, q, h: (b, h, q, 0))
    o_spec = pl.BlockSpec((1, h_tile, tile_q, Sk_pad), lambda b, q, h: (b, h, q, 0))
    if mH == 1:
        # Head-broadcast mask: the block index is constant across the innermost h axis, so the
        # (1, 1, tile_q, Sk) mask block is DMA'd once per (batch, q-tile) and stays resident.
        m_spec = pl.BlockSpec((1, 1, tile_q, Sk_pad), lambda b, q, h: (b, 0, q, 0))
    else:
        m_spec = pl.BlockSpec((1, h_tile, tile_q, Sk_pad), lambda b, q, h: (b, h, q, 0))

    out = pl.pallas_call(
        masked_softmax_kernel,
        out_shape=jax.ShapeDtypeStruct((B, H, Sq, Sk_pad), inp.dtype),
        grid_spec=pltpu.PrefetchScalarGridSpec(
            num_scalar_prefetch=0,
            grid=grid,
            in_specs=[x_spec, m_spec],
            out_specs=o_spec,
        ),
        compiler_params=pltpu.CompilerParams(
            # All three axes are independent; 'parallel' lets v7x shard them across its two
            # TensorCores (measured no-op on single-TC v5e/v6e, where tiling is the lever).
            dimension_semantics=("parallel", "parallel", "parallel"),
            vmem_limit_bytes=vmem_limit,
        ),
    )(inp_p, mask_p)

    return out[..., :Sk] if Sk_pad != Sk else out


def masked_softmax_reference(inp, mask):
    x = inp.astype(jnp.float32)
    x = jnp.where(mask != 0, jnp.finfo(jnp.float32).min, x)   # mask broadcasts over H
    return jax.nn.softmax(x, axis=-1).astype(inp.dtype)


if __name__ == "__main__":
    key = jax.random.PRNGKey(0)
    B, H, Sq, Sk = 2, 4, 16, 128

    k1, k2 = jax.random.split(key)
    scores = jax.random.normal(k1, (B, H, Sq, Sk), dtype=jnp.float32).astype(jnp.bfloat16)
    # Boolean attention mask, broadcast over heads (True = masked out); no fully-masked rows.
    mask = jax.random.bernoulli(k2, p=0.3, shape=(B, 1, Sq, Sk))
    mask = mask.at[..., 0].set(False)

    out = masked_softmax(scores, mask)
    out = jax.block_until_ready(out)

    ref = masked_softmax_reference(scores, mask)
    err = jnp.max(jnp.abs(out.astype(jnp.float32) - ref.astype(jnp.float32)))
    assert float(err) < 1e-2, f"max abs error {err}"

    print("KERNEL_OK")
</pallas_src>

<mosaic_0001>
module attributes {stable_mosaic.version = 11 : i64} {
  func.func @probe_kernel(%arg0: memref<8x128xi32, #tpu.memory_space<vmem>>, %arg1: memref<8x128xf32, #tpu.memory_space<vmem>>) attributes {dimension_semantics = [], scalar_prefetch = 0 : i64, scratch_operands = 0 : i64, tpu.core_type = #tpu.core_type<tc>} {
    %c0 = arith.constant 0 : index
    %c0_0 = arith.constant 0 : index
    %0 = vector.load %arg0[%c0, %c0_0] : memref<8x128xi32, #tpu.memory_space<vmem>>, vector<8x128xi32>
    %cst = arith.constant dense<0> : vector<8x128xi32>
    %1 = arith.cmpi ne, %0, %cst : vector<8x128xi32>
    %cst_1 = arith.constant 1.000000e+00 : f32
    %cst_2 = arith.constant 0.000000e+00 : f32
    %2 = vector.broadcast %cst_1 : f32 to vector<8x128xf32>
    %3 = vector.broadcast %cst_2 : f32 to vector<8x128xf32>
    %4 = arith.select %1, %2, %3 : vector<8x128xi1>, vector<8x128xf32>
    %c0_3 = arith.constant 0 : index
    %c0_4 = arith.constant 0 : index
    %5 = vector.load %arg1[%c0_3, %c0_4] : memref<8x128xf32, #tpu.memory_space<vmem>>, vector<8x128xf32>
    tpu.vector_store %arg1[%c0_3, %c0_4], %4 {strides = array<i32>} : memref<8x128xf32, #tpu.memory_space<vmem>>, vector<8x128xf32>,
    return
  }
}

module attributes {stable_mosaic.version = 11 : i64} {
  func.func @masked_softmax_kernel(%arg0: i32, %arg1: i32, %arg2: i32, %arg3: memref<1x4x16x128xbf16, #tpu.memory_space<vmem>>, %arg4: memref<1x1x16x128xi8, #tpu.memory_space<vmem>>, %arg5: memref<1x4x16x128xbf16, #tpu.memory_space<vmem>>) attributes {dimension_semantics = [#tpu.dimension_semantics<parallel>, #tpu.dimension_semantics<parallel>, #tpu.dimension_semantics<parallel>], iteration_bounds = array<i64: 2, 1, 1>, scalar_prefetch = 0 : i64, scratch_operands = 0 : i64, tpu.core_type = #tpu.core_type<tc>, window_params = [{transform_indices = @transform_0, window_bounds = array<i64: 1, 4, 16, 128>}, {transform_indices = @transform_1, window_bounds = array<i64: 1, 1, 16, 128>}, {transform_indices = @transform_2, window_bounds = array<i64: 1, 4, 16, 128>}]} {
    %c0 = arith.constant 0 : index
    %c0_0 = arith.constant 0 : index
    %c0_1 = arith.constant 0 : index
    %c0_2 = arith.constant 0 : index
    %0 = vector.load %arg3[%c0, %c0_0, %c0_1, %c0_2] : memref<1x4x16x128xbf16, #tpu.memory_space<vmem>>, vector<1x4x16x128xbf16>
    %1 = arith.extf %0 : vector<1x4x16x128xbf16> to vector<1x4x16x128xf32>
    %c0_3 = arith.constant 0 : index
    %c0_4 = arith.constant 0 : index
    %c0_5 = arith.constant 0 : index
    %c0_6 = arith.constant 0 : index
    %2 = vector.load %arg4[%c0_3, %c0_4, %c0_5, %c0_6] : memref<1x1x16x128xi8, #tpu.memory_space<vmem>>, vector<1x1x16x128xi8>
    %c0_i8 = arith.constant 0 : i8
    %3 = vector.broadcast %c0_i8 : i8 to vector<1x1x16x128xi8>
    %4 = arith.cmpi ne, %2, %3 : vector<1x1x16x128xi8>
    %cst = arith.constant -3.40282347E+38 : f32
    %5 = vector.shape_cast %4 : vector<1x1x16x128xi1> to vector<1x1x16x128xi1>
    %6 = vector.broadcast %5 : vector<1x1x16x128xi1> to vector<1x4x16x128xi1>
    %7 = vector.broadcast %cst : f32 to vector<1x4x16x128xf32>
    %8 = arith.select %6, %7, %1 : vector<1x4x16x128xi1>, vector<1x4x16x128xf32>
    %cst_7 = arith.constant dense<0xFF800000> : vector<1x4x16xf32>
    %9 = vector.multi_reduction <maximumf>, %8, %cst_7 [3] : vector<1x4x16x128xf32> to vector<1x4x16xf32>
    %10 = vector.shape_cast %9 : vector<1x4x16xf32> to vector<1x4x16x1xf32>
    %11 = vector.broadcast %10 : vector<1x4x16x1xf32> to vector<1x4x16x128xf32>
    %12 = arith.subf %8, %11 : vector<1x4x16x128xf32>
    %13 = math.exp %12 : vector<1x4x16x128xf32>
    %cst_8 = arith.constant dense<0.000000e+00> : vector<1x4x16xf32>
    %14 = vector.multi_reduction <add>, %13, %cst_8 [3] : vector<1x4x16x128xf32> to vector<1x4x16xf32>
    %15 = vector.shape_cast %14 : vector<1x4x16xf32> to vector<1x4x16x1xf32>
    %16 = tpu.reciprocal %15 {approx = true} : vector<1x4x16x1xf32> -> vector<1x4x16x1xf32>
    %17 = vector.broadcast %16 : vector<1x4x16x1xf32> to vector<1x4x16x128xf32>
    %18 = arith.mulf %13, %17 : vector<1x4x16x128xf32>
    %19 = arith.truncf %18 : vector<1x4x16x128xf32> to vector<1x4x16x128xbf16>
    %c0_9 = arith.constant 0 : index
    %c0_10 = arith.constant 0 : index
    %c0_11 = arith.constant 0 : index
    %c0_12 = arith.constant 0 : index
    %20 = vector.load %arg5[%c0_9, %c0_10, %c0_11, %c0_12] : memref<1x4x16x128xbf16, #tpu.memory_space<vmem>>, vector<1x4x16x128xbf16>
    tpu.vector_store %arg5[%c0_9, %c0_10, %c0_11, %c0_12], %19 {strides = array<i32>} : memref<1x4x16x128xbf16, #tpu.memory_space<vmem>>, vector<1x4x16x128xbf16>,
    return
  }
  func.func @transform_0(%arg0: i32, %arg1: i32, %arg2: i32) -> (i32, i32, i32, i32) {
    %c0_i32 = arith.constant 0 : i32
    %c0_i32_0 = arith.constant 0 : i32
    return %arg0, %arg2, %arg1, %c0_i32 : i32, i32, i32, i32
  }
  func.func @transform_1(%arg0: i32, %arg1: i32, %arg2: i32) -> (i32, i32, i32, i32) {
    %c0_i32 = arith.constant 0 : i32
    %c0_i32_0 = arith.constant 0 : i32
    %c0_i32_1 = arith.constant 0 : i32
    return %arg0, %c0_i32, %arg1, %c0_i32_0 : i32, i32, i32, i32
  }
  func.func @transform_2(%arg0: i32, %arg1: i32, %arg2: i32) -> (i32, i32, i32, i32) {
    %c0_i32 = arith.constant 0 : i32
    %c0_i32_0 = arith.constant 0 : i32
    return %arg0, %arg2, %arg1, %c0_i32 : i32, i32, i32, i32
  }
}

</mosaic_0001>

<llo_original>
// kernel: tpu_custom_call.1
$region0: #{tpu_custom_call.1}
  #allocation0 [shape = 'u32[]', space=smem, size = 0x4, offset = 0x4, fixed_abs, tag = 'smem constant byte address 0x4 - core index']
  #allocation1 [shape = 'u32[144,128]{1,0:T(1,128)}', space=vmem, size = 0x12000, scoped, tag = 'internal scratch']
  %s0 = inlined_call_operand.vmem [shape: s32[8,128], index: 0, kind: input, shape index: {}]
  %s1 = inlined_call_operand.hbm [shape: f32[8,128], index: 1, kind: output, shape index: {}]
  %s2 = sld [smem:[#allocation0]]
  $region14: #{tpu_custom_call.1} parent=0
    _
  %s4 = ssub.s32 1, %s2
  %s5 = scalar_select 0, %s4, %s2
  $region1: #{tpu_custom_call.1} parent=0
    #allocation2 [shape = 'u8[4096]{0}', space=vmem, size = 0x1000, scoped, tag = 'output window, operand 0, single buffered']
    #allocation3 [shape = 's32[1]{0}', space=sflag, size = 0x4, scoped, tag = 'scoped memory for tpu_custom_call.1']
    %6 = vsyncpa [#allocation3], 0
    // Predicated region
    $region2: #{tpu_custom_call.1} parent=1 // pred_check
      _
    $region3: #{tpu_custom_call.1} parent=1 // pred_check_branch
      %8 = sbr.rel (0) target = $region5
    $region4: #{tpu_custom_call.1} parent=1 // pred_region
      _
    $region5: #{tpu_custom_call.1} parent=1 // pred_fallthru
      _
    %v9 = vld [vmem:[%s0] sm:$0xff]
    %vm10 = vcmp.ne.s32.totalorder %v9, 0
    %v11 = vsel %vm10, 1.0, 0.0
    %12 = vst [vmem:[#allocation2] sm:$0xff] %v11
    // Predicated region
    $region6: #{tpu_custom_call.1} parent=1 // pred_check
      _
    $region7: #{tpu_custom_call.1} parent=1 // pred_check_branch
      %14 = sbr.rel (0) target = $region9
    $region8: #{tpu_custom_call.1} parent=1 // pred_region
      %s16 = ssub.s32 128, 128
      %17 = vsyncadd [#allocation3], %s16
      %s19 = sshll.u32 [#allocation2], 4
      %s20 = int_to_ptr.vmem [resolvable:$true] %s19
      %22 = dma.vmem_to_hbm [thread:$0]  %s20, 128, %s1, [#allocation3]
    $region9: #{tpu_custom_call.1} parent=1 // pred_fallthru
      _
    // Predicated region
    $region10: #{tpu_custom_call.1} parent=1 // pred_check
      _
    $region11: #{tpu_custom_call.1} parent=1 // pred_check_branch
      %24 = sbr.rel (0) target = $region13
    $region12: #{tpu_custom_call.1} parent=1 // pred_region
      %25 = dma.done [#allocation3], 128
    $region13: #{tpu_custom_call.1} parent=1 // pred_fallthru
      _
    %26 = vsyncpa [#allocation3], 1

// kernel: tpu_custom_call.1
$region0: #{tpu_custom_call.1}
  #allocation0 [shape = 'u32[]', space=smem, size = 0x4, offset = 0x4, fixed_abs, tag = 'smem constant byte address 0x4 - core index']
  #allocation1 [shape = 'u32[144,128]{1,0:T(1,128)}', space=vmem, size = 0x12000, scoped, tag = 'internal scratch']
  %s0 = inlined_call_operand.hbm [shape: bf16[2,4,16,128], index: 0, kind: input, shape index: {}]
  %s1 = inlined_call_operand.hbm [shape: s8[2,1,16,128], index: 1, kind: input, shape index: {}]
  %s2 = inlined_call_operand.hbm [shape: bf16[2,4,16,128], index: 2, kind: output, shape index: {}]
  %s3 = sld [smem:[#allocation0]]
  $region49: #{tpu_custom_call.1} parent=0
    _
  %s5 = ssub.s32 1, %s3
  %s6 = scalar_select 0, %s5, %s3
  $region1: #{tpu_custom_call.1} parent=0
    #allocation2 [shape = 'u8[32768]{0}', space=vmem, size = 0x8000, scoped, tag = 'input window, operand 0']
    #allocation3 [shape = 's32[2]{0}', space=sflag, size = 0x8, scoped, tag = 'scoped memory for tpu_custom_call.1']
    #allocation4 [shape = 's32[2]{0}', space=sflag, size = 0x8, scoped, tag = 'scoped memory for tpu_custom_call.1']
    #allocation5 [shape = 'u8[4096]{0}', space=vmem, size = 0x1000, scoped, tag = 'input window, operand 1']
    #allocation6 [shape = 's32[2]{0}', space=sflag, size = 0x8, scoped, tag = 'scoped memory for tpu_custom_call.1']
    #allocation7 [shape = 'u8[32768]{0}', space=vmem, size = 0x8000, scoped, tag = 'output window, operand 0']
    %7 = vsyncpa [#allocation3], 0
    %s8 = scalar_lea.sflag [#allocation3], 1
    %9 = vsyncpa %s8, 0
    %10 = vsyncpa [#allocation6], 0
    %s11 = scalar_lea.sflag [#allocation6], 1
    %12 = vsyncpa %s11, 0
    %13 = vsyncpa [#allocation4], 0
    %s14 = scalar_lea.sflag [#allocation4], 1
    %15 = vsyncpa %s14, 0
    loop: start=0, step=1, limit=4
    $region2: #{tpu_custom_call.1} parent=1 // loop_pre_header
      _
    $region3: #{tpu_custom_call.1} parent=1 // loop_header
      %s17 = sphi 0, %s21
      %p18 = scmp.ge.s32.totalorder %s17, 4
      %s24 = sphi 0, %s43
      %s25 = sphi 0, %s39
      %s26 = sphi 0, %s35
      %s27 = sphi 0, %s24
      %s28 = sphi 0, %s25
      %s29 = sphi 0, %s26
      %s30 = sphi 0, %s27
      %s31 = sphi 0, %s28
      %s32 = sphi 0, %s29
      %s50 = sphi 0, %s52
      %s53 = sphi 0, %s50
      %s54 = sphi 0, %s53
      %s70 = sphi 0, %s54
      %s78 = sphi 0, %s80
      %s81 = sphi 0, %s78
      %s82 = sphi 0, %s81
      %s98 = sphi 0, %s82
      %s108 = sphi 0, %s110
      %s111 = sphi 0, %s108
      %s112 = sphi 0, %s111
      %s128 = sphi 0, %s112
    $region4: #{tpu_custom_call.1} parent=1 // loop_header_branch
      %20 = sbr.rel (%p18) target = $region8
    $region5: #{tpu_custom_call.1} parent=1 // loop_body
      %s22 = ssub.s32 %s17, 1
      %s23 = ssub.s32 %s17, 2
      %s33 = sadd.s32 1, %s26
      %p34 = scmp.ge.s32.totalorder %s33, 1
      %s35 = scalar_select %p34, 0, %s33
      %s36 = sadd.s32 1, %s25
      %s37 = scalar_select %p34, %s36, %s25
      %p38 = scmp.ge.s32.totalorder %s37, 1
      %s39 = scalar_select %p38, 0, %s37
      %s40 = sadd.s32 1, %s24
      %s41 = scalar_select %p38, %s40, %s24
      %p42 = scmp.ge.s32.totalorder %s41, 2
      %s43 = scalar_select %p42, 0, %s41
      %s44 = ssub.s32 %s24, %s43
      %s45 = ssub.s32 %s26, %s35
      %s46 = sor.u32 %s44, %s45
      %s47 = ssub.s32 %s25, %s39
      %s48 = sor.u32 %s46, %s47
      %p49 = scmp.eq.s32.totalorder %s48, 0
      %s51 = sadd.s32 %s50, 1
      %s52 = scalar_select %p49, %s50, %s51
      %p55 = pneg %p49
      %p56 = scmp.eq.s32.totalorder %s17, 1
      %p57 = por %p55, %p56
      %p58 = scmp.ne.s32.totalorder %s50, %s53
      %p59 = scmp.eq.s32.totalorder %s17, 0
      %p60 = por %p58, %p59
      %p61 = scmp.ne.s32.totalorder %s50, %s53
      %p62 = scmp.eq.s32.totalorder %s22, 1
      %p63 = por %p61, %p62
      %p64 = scmp.ne.s32.totalorder %s53, %s54
      %p65 = scmp.eq.s32.totalorder %s22, 0
      %p66 = por %p64, %p65
      %p67 = scmp.ne.s32.totalorder %s53, %s54
      %p68 = scmp.eq.s32.totalorder %s23, 1
      %p69 = por %p67, %p68
      %p71 = scmp.ne.s32.totalorder %s54, %s70
      %p72 = scmp.eq.s32.totalorder %s23, 0
      %p73 = por %p71, %p72
      %s74 = ssub.s32 %s24, %s43
      %s75 = ssub.s32 %s25, %s39
      %s76 = sor.u32 %s74, %s75
      %p77 = scmp.eq.s32.totalorder %s76, 0
      %s79 = sadd.s32 %s78, 1
      %s80 = scalar_select %p77, %s78, %s79
      %p83 = pneg %p77
      %p84 = scmp.eq.s32.totalorder %s17, 1
      %p85 = por %p83, %p84
      %p86 = scmp.ne.s32.totalorder %s78, %s81
      %p87 = scmp.eq.s32.totalorder %s17, 0
      %p88 = por %p86, %p87
      %p89 = scmp.ne.s32.totalorder %s78, %s81
      %p90 = scmp.eq.s32.totalorder %s22, 1
      %p91 = por %p89, %p90
      %p92 = scmp.ne.s32.totalorder %s81, %s82
      %p93 = scmp.eq.s32.totalorder %s22, 0
      %p94 = por %p92, %p93
      %p95 = scmp.ne.s32.totalorder %s81, %s82
      %p96 = scmp.eq.s32.totalorder %s23, 1
      %p97 = por %p95, %p96
      %p99 = scmp.ne.s32.totalorder %s82, %s98
      %p100 = scmp.eq.s32.totalorder %s23, 0
      %p101 = por %p99, %p100
      %s102 = ssub.s32 %s24, %s43
      %s103 = ssub.s32 %s26, %s35
      %s104 = sor.u32 %s102, %s103
      %s105 = ssub.s32 %s25, %s39
      %s106 = sor.u32 %s104, %s105
      %p107 = scmp.eq.s32.totalorder %s106, 0
      %s109 = sadd.s32 %s108, 1
      %s110 = scalar_select %p107, %s108, %s109
      %p113 = pneg %p107
      %p114 = scmp.eq.s32.totalorder %s17, 1
      %p115 = por %p113, %p114
      %p116 = scmp.ne.s32.totalorder %s108, %s111
      %p117 = scmp.eq.s32.totalorder %s17, 0
      %p118 = por %p116, %p117
      %p119 = scmp.ne.s32.totalorder %s108, %s111
      %p120 = scmp.eq.s32.totalorder %s22, 1
      %p121 = por %p119, %p120
      %p122 = scmp.ne.s32.totalorder %s111, %s112
      %p123 = scmp.eq.s32.totalorder %s22, 0
      %p124 = por %p122, %p123
      %p125 = scmp.ne.s32.totalorder %s111, %s112
      %p126 = scmp.eq.s32.totalorder %s23, 1
      %p127 = por %p125, %p126
      %p129 = scmp.ne.s32.totalorder %s112, %s128
      %p130 = scmp.eq.s32.totalorder %s23, 0
      %p131 = por %p129, %p130
      %p132 = scmp.le.s32.totalorder 1, %s17
      %p133 = scmp.lt.s32.totalorder %s17, 3
      %p134 = pnand %p132, %p133
      %p135 = pneg %p134
      // Predicated region
      $region9: #{tpu_custom_call.1} parent=5 // pred_check
        _
      $region10: #{tpu_custom_call.1} parent=5 // pred_check_branch
        %137 = sbr.rel (%p134) target = $region12
      $region11: #{tpu_custom_call.1} parent=5 // pred_region
        %s138 = ssub.s32 %s17, 1
      $region12: #{tpu_custom_call.1} parent=5 // pred_fallthru
        _
      %p139 = scmp.lt.s32.totalorder %s17, 2
      // Predicated region
      $region13: #{tpu_custom_call.1} parent=5 // pred_check
        %p140 = pneg %p139
      $region14: #{tpu_custom_call.1} parent=5 // pred_check_branch
        %142 = sbr.rel (%p140) target = $region16
      $region15: #{tpu_custom_call.1} parent=5 // pred_region
        // Predicated region
        $region17: #{tpu_custom_call.1} parent=15 // pred_check
          %p143 = pneg %p60
        $region18: #{tpu_custom_call.1} parent=15 // pred_check_branch
          %145 = sbr.rel (%p143) target = $region20
        $region19: #{tpu_custom_call.1} parent=15 // pred_region
          %s146 = sand.u32 %s50, 1
          %s147 = scalar_lea.sflag [#allocation3], %s146
          %s148 = sand.u32 %s50, 1
          %s149 = smul.addr %s148, 32
          %s150 = scalar_lea.vmem [#allocation2], %s149
          %s151 = smul.u32 4, %s26
          %s152 = smul.u32 2, %s25
          %s154 = ssub.s32 512, 512
          %155 = vsyncadd %s147, %s154
          %s156 = smul.addr %s151, 2
          %s157 = sadd.s32 %s152, %s156
          %s158 = smul.addr %s24, 8
          %s159 = sadd.s32 %s157, %s158
          %s160 = smul.addr %s159, 64
          %s161 = scalar_lea.hbm %s0, %s160
          %s162 = sshll.u32 %s150, 4
          %s163 = int_to_ptr.vmem [resolvable:$true] %s162
          %168 = dma.hbm_to_vmem [thread:$0]  %s161, 512, %s163, %s147, 64, 64, 4
        $region20: #{tpu_custom_call.1} parent=15 // pred_fallthru
          _
        // Predicated region
        $region21: #{tpu_custom_call.1} parent=15 // pred_check
          %p169 = pneg %p88
        $region22: #{tpu_custom_call.1} parent=15 // pred_check_branch
          %171 = sbr.rel (%p169) target = $region24
        $region23: #{tpu_custom_call.1} parent=15 // pred_region
          %s172 = sand.u32 %s78, 1
          %s173 = scalar_lea.sflag [#allocation6], %s172
          %s174 = sand.u32 %s78, 1
          %s175 = smul.addr %s174, 4
          %s176 = scalar_lea.vmem [#allocation5], %s175
          %s177 = smul.u32 2, %s25
          %s179 = ssub.s32 64, 64
          %180 = vsyncadd %s173, %s179
          %s181 = smul.addr %s24, 2
          %s182 = sadd.s32 %s177, %s181
          %s183 = smul.addr %s182, 32
          %s184 = scalar_lea.hbm %s1, %s183
          %s185 = sshll.u32 %s176, 4
          %s186 = int_to_ptr.vmem [resolvable:$true] %s185
          %191 = dma.hbm_to_vmem [thread:$0]  %s184, 64, %s186, %s173, 32, 32, 2
        $region24: #{tpu_custom_call.1} parent=15 // pred_fallthru
          _
      $region16: #{tpu_custom_call.1} parent=5 // pred_fallthru
        _
      %p192 = scmp.le.s32.totalorder 1, %s17
      %p193 = scmp.lt.s32.totalorder %s17, 3
      %p194 = pnand %p192, %p193
      %p195 = pneg %p194
      // Predicated region
      $region25: #{tpu_custom_call.1} parent=5 // pred_check
        _
      $region26: #{tpu_custom_call.1} parent=5 // pred_check_branch
        %197 = sbr.rel (%p194) target = $region28
      $region27: #{tpu_custom_call.1} parent=5 // pred_region
        %s198 = ssub.s32 %s17, 1
        %s199 = sand.u32 %s53, 1
        %s200 = scalar_lea.sflag [#allocation3], %s199
        %s201 = sand.u32 %s53, 1
        %s202 = smul.addr %s201, 32
        %s203 = scalar_lea.vmem [#allocation2], %s202
        // Predicated region
        $region29: #{tpu_custom_call.1} parent=27 // pred_check
          %p204 = pneg %p66
        $region30: #{tpu_custom_call.1} parent=27 // pred_check_branch
          %206 = sbr.rel (%p204) target = $region32
        $region31: #{tpu_custom_call.1} parent=27 // pred_region
          %207 = dma.done %s200, 512
        $region32: #{tpu_custom_call.1} parent=27 // pred_fallthru
          _
        %s208 = sand.u32 %s81, 1
        %s209 = scalar_lea.sflag [#allocation6], %s208
        %s210 = sand.u32 %s81, 1
        %s211 = smul.addr %s210, 4
        %s212 = scalar_lea.vmem [#allocation5], %s211
        // Predicated region
        $region33: #{tpu_custom_call.1} parent=27 // pred_check
          %p213 = pneg %p94
        $region34: #{tpu_custom_call.1} parent=27 // pred_check_branch
          %215 = sbr.rel (%p213) target = $region36
        $region35: #{tpu_custom_call.1} parent=27 // pred_region
          %216 = dma.done %s209, 64
        $region36: #{tpu_custom_call.1} parent=27 // pred_fallthru
          _
        %s217 = sand.u32 %s53, 1
        %s218 = scalar_lea.sflag [#allocation3], %s217
        %s219 = sand.u32 %s53, 1
        %s220 = smul.addr %s219, 32
        %s221 = scalar_lea.vmem [#allocation2], %s220
        %p222 = pneg %p66
        %p223 = pneg %p63
        %s224 = sand.u32 %s81, 1
        %s225 = scalar_lea.sflag [#allocation6], %s224
        %s226 = sand.u32 %s81, 1
        %s227 = smul.addr %s226, 4
        %s228 = scalar_lea.vmem [#allocation5], %s227
        %p229 = pneg %p94
        %p230 = pneg %p91
        %p231 = pneg %p124
        %p232 = pneg %p121
        %s233 = sand.u32 %s111, 1
        %s234 = scalar_lea.sflag [#allocation4], %s233
        %s235 = sand.u32 %s111, 1
        %s236 = smul.addr %s235, 32
        %s237 = scalar_lea.vmem [#allocation7], %s236
        %s238 = smul.u32 4, %s29
        %s239 = smul.u32 2, %s28
        %s240 = smul.u32 2, %s28
        %s241 = smul.u32 4, %s29
        %s242 = smul.u32 2, %s28
        %v245 = vld [vmem:[%s203] sm:$0xf]
        %v246 = vld [vmem:[%s203 + $0x4] sm:$0xf]
        %v247 = vld [vmem:[%s203 + $0x8] sm:$0xf]
        %v248 = vld [vmem:[%s203 + $0xc] sm:$0xf]
        %v249 = vld [vmem:[%s203 + $0x10] sm:$0xf]
        %v250 = vld [vmem:[%s203 + $0x14] sm:$0xf]
        %v251 = vld [vmem:[%s203 + $0x18] sm:$0xf]
        %v252 = vld [vmem:[%s203 + $0x1c] sm:$0xf]
        %v253 = vunpack.c.l.bf16 %v245
        %v254 = vunpack.c.l.bf16 %v246
        %v255 = vunpack.c.l.bf16 %v247
        %v256 = vunpack.c.l.bf16 %v248
        %v257 = vunpack.c.l.bf16 %v249
        %v258 = vunpack.c.l.bf16 %v250
        %v259 = vunpack.c.l.bf16 %v251
        %v260 = vunpack.c.l.bf16 %v252
        %v261 = vld [vmem:[%s212] sm:$0x3]
        %v262 = vld [vmem:[%s212 + $0x2] sm:$0x3]
        %vm263 = vnez %v261
        %vm264 = vnez %v262
        %v265 = vsel %vm263, 16843009, 0
        %v266 = vsel %vm264, 16843009, 0
        %v267 = vunpack.c.0.s8 %v265
        %v268 = vunpack.c.0.s8 %v266
        %vm269 = vcmp.ne.s32.totalorder %v267, 0
        %vm270 = vcmp.ne.s32.totalorder %v268, 0
        %v271 = vsel %vm269, 1, 0
        %v272 = vsel %vm270, 1, 0
        %vm273 = vcmp.eq.s32.totalorder %v271, 1
        %vm274 = vcmp.eq.s32.totalorder %v272, 1
        %v275 = vsel %vm273, -3.4028235e+38, %v253
        %v276 = vsel %vm274, -3.4028235e+38, %v254
        %v277 = vsel %vm273, -3.4028235e+38, %v255
        %v278 = vsel %vm274, -3.4028235e+38, %v256
        %v279 = vsel %vm273, -3.4028235e+38, %v257
        %v280 = vsel %vm274, -3.4028235e+38, %v258
        %v281 = vsel %vm273, -3.4028235e+38, %v259
        %v282 = vsel %vm274, -3.4028235e+38, %v260
        %283 = vmax.xlane.f32.xlu0 %v275
        %v284 = vpop.xlane.xlu0 %283
        %285 = vmax.xlane.f32.xlu0 %v276
        %v286 = vpop.xlane.xlu0 %285
        %287 = vmax.xlane.f32.xlu0 %v277
        %v288 = vpop.xlane.xlu0 %287
        %289 = vmax.xlane.f32.xlu0 %v278
        %v290 = vpop.xlane.xlu0 %289
        %291 = vmax.xlane.f32.xlu0 %v279
        %v292 = vpop.xlane.xlu0 %291
        %293 = vmax.xlane.f32.xlu0 %v280
        %v294 = vpop.xlane.xlu0 %293
        %295 = vmax.xlane.f32.xlu0 %v281
        %v296 = vpop.xlane.xlu0 %295
        %297 = vmax.xlane.f32.xlu0 %v282
        %v298 = vpop.xlane.xlu0 %297
        %v299 = vsub.f32 %v275, %v284
        %v300 = vsub.f32 %v276, %v286
        %v301 = vsub.f32 %v277, %v288
        %v302 = vsub.f32 %v278, %v290
        %v303 = vsub.f32 %v279, %v292
        %v304 = vsub.f32 %v280, %v294
        %v305 = vsub.f32 %v281, %v296
        %v306 = vsub.f32 %v282, %v298
        %v307 = vmul.f32 %v299, 1.442695
        %v308 = vpow.pop %v307
        %v309 = vmul.f32 %v300, 1.442695
        %v310 = vpow.pop %v309
        %v311 = vmul.f32 %v301, 1.442695
        %v312 = vpow.pop %v311
        %v313 = vmul.f32 %v302, 1.442695
        %v314 = vpow.pop %v313
        %v315 = vmul.f32 %v303, 1.442695
        %v316 = vpow.pop %v315
        %v317 = vmul.f32 %v304, 1.442695
        %v318 = vpow.pop %v317
        %v319 = vmul.f32 %v305, 1.442695
        %v320 = vpow.pop %v319
        %v321 = vmul.f32 %v306, 1.442695
        %v322 = vpow.pop %v321
        %323 = vadd.xlane.f32.xlu0 %v308
        %v324 = vpop.xlane.xlu0 %323
        %325 = vadd.xlane.f32.xlu0 %v310
        %v326 = vpop.xlane.xlu0 %325
        %327 = vadd.xlane.f32.xlu0 %v312
        %v328 = vpop.xlane.xlu0 %327
        %329 = vadd.xlane.f32.xlu0 %v314
        %v330 = vpop.xlane.xlu0 %329
        %331 = vadd.xlane.f32.xlu0 %v316
        %v332 = vpop.xlane.xlu0 %331
        %333 = vadd.xlane.f32.xlu0 %v318
        %v334 = vpop.xlane.xlu0 %333
        %335 = vadd.xlane.f32.xlu0 %v320
        %v336 = vpop.xlane.xlu0 %335
        %337 = vadd.xlane.f32.xlu0 %v322
        %v338 = vpop.xlane.xlu0 %337
        %v339 = vrcp.pop %v324
        %v340 = vrcp.pop %v326
        %v341 = vrcp.pop %v328
        %v342 = vrcp.pop %v330
        %v343 = vrcp.pop %v332
        %v344 = vrcp.pop %v334
        %v345 = vrcp.pop %v336
        %v346 = vrcp.pop %v338
        %v347 = vmul.f32 %v308, %v339
        %v348 = vmul.f32 %v310, %v340
        %v349 = vmul.f32 %v312, %v341
        %v350 = vmul.f32 %v314, %v342
        %v351 = vmul.f32 %v316, %v343
        %v352 = vmul.f32 %v318, %v344
        %v353 = vmul.f32 %v320, %v345
        %v354 = vmul.f32 %v322, %v346
        %v355 = vpack.c.bf16 %v348, %v347
        %v356 = vpack.c.bf16 %v350, %v349
        %v357 = vpack.c.bf16 %v352, %v351
        %v358 = vpack.c.bf16 %v354, %v353
        %v363 = vunpack.c.l.b16 %v355
        %v364 = vunpack.c.h.b16 %v355
        %v365 = vunpack.c.l.b16 %v356
        %v366 = vunpack.c.h.b16 %v356
        %v367 = vunpack.c.l.b16 %v357
        %v368 = vunpack.c.h.b16 %v357
        %v369 = vunpack.c.l.b16 %v358
        %v370 = vunpack.c.h.b16 %v358
        %v371 = vpack.c.b16 %v363, %v363
        %v372 = vpack.c.b16 %v364, %v364
        %v373 = vpack.c.b16 %v365, %v365
        %v374 = vpack.c.b16 %v366, %v366
        %v375 = vpack.c.b16 %v367, %v367
        %v376 = vpack.c.b16 %v368, %v368
        %v377 = vpack.c.b16 %v369, %v369
        %v378 = vpack.c.b16 %v370, %v370
        %387 = vst [vmem:[%s237] sm:$0xf] %v371
        %388 = vst [vmem:[%s237 + $0x4] sm:$0xf] %v372
        %389 = vst [vmem:[%s237 + $0x8] sm:$0xf] %v373
        %390 = vst [vmem:[%s237 + $0xc] sm:$0xf] %v374
        %391 = vst [vmem:[%s237 + $0x10] sm:$0xf] %v375
        %392 = vst [vmem:[%s237 + $0x14] sm:$0xf] %v376
        %393 = vst [vmem:[%s237 + $0x18] sm:$0xf] %v377
        %394 = vst [vmem:[%s237 + $0x1c] sm:$0xf] %v378
        %s395 = sand.u32 %s111, 1
        %s396 = scalar_lea.sflag [#allocation4], %s395
        %s397 = sand.u32 %s111, 1
        %s398 = smul.addr %s397, 32
        %s399 = scalar_lea.vmem [#allocation7], %s398
        // Predicated region
        $region37: #{tpu_custom_call.1} parent=27 // pred_check
          %p400 = pneg %p121
        $region38: #{tpu_custom_call.1} parent=27 // pred_check_branch
          %402 = sbr.rel (%p400) target = $region40
        $region39: #{tpu_custom_call.1} parent=27 // pred_region
          %s403 = smul.u32 4, %s29
          %s404 = smul.u32 2, %s28
          %s406 = ssub.s32 512, 512
          %407 = vsyncadd %s396, %s406
          %s408 = smul.addr %s403, 2
          %s409 = sadd.s32 %s404, %s408
          %s410 = smul.addr %s27, 8
          %s411 = sadd.s32 %s409, %s410
          %s412 = smul.addr %s411, 64
          %s413 = scalar_lea.hbm %s2, %s412
          %s414 = sshll.u32 %s399, 4
          %s415 = int_to_ptr.vmem [resolvable:$true] %s414
          %420 = dma.vmem_to_hbm [thread:$0]  %s415, 512, %s413, %s396, 64, 64, 4
        $region40: #{tpu_custom_call.1} parent=27 // pred_fallthru
          _
      $region28: #{tpu_custom_call.1} parent=5 // pred_fallthru
        _
      %p421 = scmp.le.s32.totalorder 2, %s17
      // Predicated region
      $region41: #{tpu_custom_call.1} parent=5 // pred_check
        %p422 = pneg %p421
      $region42: #{tpu_custom_call.1} parent=5 // pred_check_branch
        %424 = sbr.rel (%p422) target = $region44
      $region43: #{tpu_custom_call.1} parent=5 // pred_region
        %s425 = ssub.s32 %s17, 2
        // Predicated region
        $region45: #{tpu_custom_call.1} parent=43 // pred_check
          %p426 = pneg %p127
        $region46: #{tpu_custom_call.1} parent=43 // pred_check_branch
          %428 = sbr.rel (%p426) target = $region48
        $region47: #{tpu_custom_call.1} parent=43 // pred_region
          %s429 = sand.u32 %s112, 1
          %s430 = scalar_lea.sflag [#allocation4], %s429
          %s431 = sand.u32 %s112, 1
          %s432 = smul.addr %s431, 32
          %s433 = scalar_lea.vmem [#allocation7], %s432
          %434 = dma.done %s430, 512
        $region48: #{tpu_custom_call.1} parent=43 // pred_fallthru
          _
      $region44: #{tpu_custom_call.1} parent=5 // pred_fallthru
        _
    $region6: #{tpu_custom_call.1} parent=1 // loop_footer
      %s21 = sadd.s32 1, %s17
    $region7: #{tpu_custom_call.1} parent=1 // loop_footer_branch
      %16 = sbr.rel target = $region3
    $region8: #{tpu_custom_call.1} parent=1 // loop_exit
      _
    %435 = vsyncpa [#allocation3], 1
    %s436 = scalar_lea.sflag [#allocation3], 1
    %437 = vsyncpa %s436, 1
    %438 = vsyncpa [#allocation6], 1
    %s439 = scalar_lea.sflag [#allocation6], 1
    %440 = vsyncpa %s439, 1
    %441 = vsyncpa [#allocation4], 1
    %s442 = scalar_lea.sflag [#allocation4], 1
    %443 = vsyncpa %s442, 1

</llo_original>
